<compile_context>
chip_gen: v7x
topology: tpu7x:2x2x1
jax: 0.10.0
libtpu: 0.0.40
codegen_flags: <defaults>
</compile_context>

<pallas_src>
import functools

import numpy as np

import jax
import jax.numpy as jnp
from jax import lax
from jax.experimental import pallas as pl
from jax.experimental.pallas import tpu as pltpu


# --------------------------------------------------------------------------
# pltpu.roll direction probe (cached; runs eagerly, outside jit, exactly once).
# Returns sign s such that pltpu.roll(x, (s*delta) % n, axis=1)[..., p] == x[..., p+delta].
# --------------------------------------------------------------------------
@functools.lru_cache(maxsize=None)
def _roll_sign():
    def probe_kernel(x_ref, o_ref):
        o_ref[...] = pltpu.roll(x_ref[...], shift=3, axis=1)

    x = jnp.arange(8 * 128, dtype=jnp.float32).reshape(8, 128)
    out = pl.pallas_call(
        probe_kernel, out_shape=jax.ShapeDtypeStruct((8, 128), jnp.float32)
    )(x)
    out = jax.block_until_ready(out)
    if bool(jnp.array_equal(out, jnp.roll(x, 3, axis=1))):
        return -1  # pltpu.roll matches jnp.roll: out[p] = x[p - shift]
    if bool(jnp.array_equal(out, jnp.roll(x, -3, axis=1))):
        return 1   # opposite direction: out[p] = x[p + shift]
    raise NotImplementedError("unrecognized pltpu.roll semantics")


# --------------------------------------------------------------------------
# Per-tap validity masks (trace-time numpy constants): mask[t, 0, p] = 1 iff
# source pixel (i+dh, j+dw) of flat output pixel p lies inside the image.
# --------------------------------------------------------------------------
def _make_tap_masks(H, W, d):
    p = np.arange(H * W)
    i, j = p // W, p % W
    masks = np.zeros((9, 1, H * W), np.float32)
    t = 0
    for kh in range(3):
        for kw in range(3):
            dh, dw = (kh - 1) * d, (kw - 1) * d
            ok = (i + dh >= 0) & (i + dh < H) & (j + dw >= 0) & (j + dw < W)
            masks[t, 0] = ok.astype(np.float32)
            t += 1
    return masks


# --------------------------------------------------------------------------
# Fused kernel: relu(bn2(conv2(relu(bn1(conv1(x))))) + bn_sc(conv1x1(x)))
# --------------------------------------------------------------------------
def _fused_block_kernel(x_ref, m_ref, w1_ref, b1_ref, w2_ref, b2c_ref,
                        wsc_ref, o_ref, *, d, H, W, roll_sign):
    # x_ref:  (1, Cin, HW)      m_ref:  (9, 1, HW)
    # w1_ref: (9, Cout, Cin)    w2_ref: (9, Cout, Cout)   wsc_ref: (Cout, Cin)
    # b1_ref: (Cout, 1)         b2c_ref:(Cout, 1) = folded bn2 bias + bn_sc bias
    # o_ref:  (1, Cout, HW)
    HW = H * W
    x = x_ref[0]  # (Cin, HW): channels on sublanes, flat spatial on lanes

    def conv3x3(a, w_ref, acc=None):
        t = 0
        for kh in range(3):
            for kw in range(3):
                dh, dw = (kh - 1) * d, (kw - 1) * d
                delta = dh * W + dw
                if delta == 0:
                    tap = a  # center tap: no shift, always valid
                else:
                    s = (roll_sign * delta) % HW
                    shifted = pltpu.roll(a, shift=s, axis=1) if s != 0 else a
                    tap = shifted * m_ref[t]  # zero wrapped / out-of-image lanes
                contrib = jnp.dot(w_ref[t], tap,
                                  preferred_element_type=jnp.float32)
                acc = contrib if acc is None else acc + contrib
                t += 1
        return acc

    # conv1 -> (folded) bn1 -> relu ; y1 lives entirely in registers/VMEM.
    y1 = jnp.maximum(conv3x3(x, w1_ref) + b1_ref[...], 0.0)          # (Cout, HW)

    # shortcut 1x1 conv result seeds the conv2 accumulator (saves extra adds).
    sc = jnp.dot(wsc_ref[...], x, preferred_element_type=jnp.float32)  # (Cout, HW)

    # conv2 -> (folded) bn2, plus folded shortcut-BN bias, residual add, relu.
    out = conv3x3(y1, w2_ref, acc=sc) + b2c_ref[...]
    o_ref[0] = jnp.maximum(out, 0.0)


# --------------------------------------------------------------------------
# Parameter preparation: fold eval-mode BN into conv weights / biases.
# --------------------------------------------------------------------------
def prepare_params(params, eps=1e-5):
    def fold(gamma, beta, mean, var):
        scale = gamma / jnp.sqrt(var + eps)
        return scale, beta - mean * scale

    s1, b1 = fold(*params["bn1"])
    s2, b2 = fold(*params["bn2"])
    ssc, bsc = fold(*params["bn_sc"])

    def fold_conv3(w_hwio, scale):
        # (3,3,Cin,Cout) -> (9, Cout, Cin), BN scale folded along Cout.
        cin, cout = w_hwio.shape[2], w_hwio.shape[3]
        w = jnp.transpose(w_hwio, (0, 1, 3, 2)).reshape(9, cout, cin)
        return (w * scale[None, :, None]).astype(jnp.float32)

    Cout = params["w1"].shape[-1]
    return {
        "w1": fold_conv3(params["w1"], s1),
        "b1": b1.reshape(Cout, 1).astype(jnp.float32),
        "w2": fold_conv3(params["w2"], s2),
        # bn2 bias and bn_sc bias are applied at the same point -> pre-sum them.
        "b2c": (b2 + bsc).reshape(Cout, 1).astype(jnp.float32),
        "w_sc": (params["w_sc"].T * ssc[:, None]).astype(jnp.float32),
    }


# --------------------------------------------------------------------------
# Public forward: NCHW in, NCHW out (no boundary transposes, no wrapper pads).
# --------------------------------------------------------------------------
def basic_residual_block(x_nchw, prep, *, dilation_rate=1):
    d = dilation_rate
    N, Cin, H, W = x_nchw.shape
    Cout = prep["w1"].shape[1]
    HW = H * W

    roll_sign = _roll_sign()  # eager cached probe; prime before jitting this wrapper

    x_flat = x_nchw.reshape(N, Cin, HW).astype(jnp.float32)   # free metadata reshape
    masks = jnp.asarray(_make_tap_masks(H, W, d))

    args = (x_flat, masks, prep["w1"], prep["b1"], prep["w2"], prep["b2c"],
            prep["w_sc"])

    flops = 2 * N * HW * Cout * (9 * Cin + 9 * Cout + Cin)
    bytes_accessed = 4 * (sum(int(a.size) for a in args) + N * Cout * HW)

    out_flat = pl.pallas_call(
        functools.partial(_fused_block_kernel, d=d, H=H, W=W,
                          roll_sign=roll_sign),
        out_shape=jax.ShapeDtypeStruct((N, Cout, HW), jnp.float32),
        grid=(N,),
        in_specs=[
            pl.BlockSpec((1, Cin, HW), lambda n: (n, 0, 0)),
            pl.BlockSpec((9, 1, HW), lambda n: (0, 0, 0)),
            pl.BlockSpec((9, Cout, Cin), lambda n: (0, 0, 0)),
            pl.BlockSpec((Cout, 1), lambda n: (0, 0)),
            pl.BlockSpec((9, Cout, Cout), lambda n: (0, 0, 0)),
            pl.BlockSpec((Cout, 1), lambda n: (0, 0)),
            pl.BlockSpec((Cout, Cin), lambda n: (0, 0)),
        ],
        out_specs=pl.BlockSpec((1, Cout, HW), lambda n: (n, 0, 0)),
        compiler_params=pltpu.CompilerParams(
            dimension_semantics=("parallel",)),   # batch shards across v7x's 2 TCs
        cost_estimate=pl.CostEstimate(flops=flops, transcendentals=0,
                                      bytes_accessed=bytes_accessed),
    )(*args)

    return out_flat.reshape(N, Cout, H, W)        # free metadata reshape


# --------------------------------------------------------------------------
# Pure-JAX reference (for correctness check), takes the raw parameters.
# --------------------------------------------------------------------------
def _ref_block(x_nchw, params, *, dilation_rate=1, eps=1e-5):
    d = dilation_rate
    x = jnp.transpose(x_nchw, (0, 2, 3, 1)).astype(jnp.float32)
    dn = ("NHWC", "HWIO", "NHWC")

    def conv(a, w, dil):
        return lax.conv_general_dilated(
            a, w, window_strides=(1, 1),
            padding=[(dil, dil), (dil, dil)] if w.shape[0] == 3 else [(0, 0), (0, 0)],
            rhs_dilation=(dil, dil), dimension_numbers=dn,
        )

    def bn(a, g, b, m, v):
        return (a - m) / jnp.sqrt(v + eps) * g + b

    sc = bn(conv(x, params["w_sc"][None, None], 1), *params["bn_sc"])
    y = jax.nn.relu(bn(conv(x, params["w1"], d), *params["bn1"]))
    y = bn(conv(y, params["w2"], d), *params["bn2"])
    y = jax.nn.relu(y + sc)
    return jnp.transpose(y, (0, 3, 1, 2))


# --------------------------------------------------------------------------
if __name__ == "__main__":
    # Shapes consistent with the module: batch=2, in_channels=4, out_channels=8,
    # spatial=16x16, stride=1, dilation_rate=1 (non-identity shortcut path).
    N, Cin, Cout, H, W = 2, 4, 8, 16, 16
    dilation_rate = 1

    key = jax.random.PRNGKey(0)
    ks = jax.random.split(key, 11)

    def randn(k, shape, scale=0.1):
        return (scale * jax.random.normal(k, shape)).astype(jnp.float32)

    params = {
        # conv weights in HWIO (equivalent to transposed PyTorch OIHW weights)
        "w1": randn(ks[0], (3, 3, Cin, Cout)),
        "w2": randn(ks[1], (3, 3, Cout, Cout)),
        "w_sc": randn(ks[2], (Cin, Cout)),
        # batchnorm (gamma, beta, running_mean, running_var), eval-mode semantics
        "bn1": (1.0 + randn(ks[3], (Cout,)), randn(ks[4], (Cout,)),
                randn(ks[5], (Cout,)), 0.5 + jnp.abs(randn(ks[6], (Cout,), 1.0))),
        "bn2": (1.0 + randn(ks[7], (Cout,)), randn(ks[8], (Cout,)),
                jnp.zeros((Cout,), jnp.float32), jnp.ones((Cout,), jnp.float32)),
        "bn_sc": (jnp.ones((Cout,), jnp.float32), jnp.zeros((Cout,), jnp.float32),
                  randn(ks[9], (Cout,)), jnp.ones((Cout,), jnp.float32)),
    }
    x = jax.random.normal(ks[10], (N, Cin, H, W), dtype=jnp.float32)

    prep = prepare_params(params)  # one-time BN folding (constant transform)

    out = basic_residual_block(x, prep, dilation_rate=dilation_rate)
    out = jax.block_until_ready(out)

    ref = _ref_block(x, params, dilation_rate=dilation_rate)
    assert out.shape == (N, Cout, H, W), out.shape
    err = float(jnp.max(jnp.abs(out - ref)))
    assert jnp.allclose(out, ref, atol=1e-4, rtol=1e-4), err

    print("KERNEL_OK")
</pallas_src>

<mosaic_0001>
module attributes {stable_mosaic.version = 11 : i64} {
  func.func @probe_kernel(%arg0: memref<8x128xf32, #tpu.memory_space<vmem>>, %arg1: memref<8x128xf32, #tpu.memory_space<vmem>>) attributes {dimension_semantics = [], scalar_prefetch = 0 : i64, scratch_operands = 0 : i64, tpu.core_type = #tpu.core_type<tc>} {
    %c0 = arith.constant 0 : index
    %c0_0 = arith.constant 0 : index
    %0 = vector.load %arg0[%c0, %c0_0] : memref<8x128xf32, #tpu.memory_space<vmem>>, vector<8x128xf32>
    %c3_i32 = arith.constant 3 : i32
    %1 = tpu.dynamic_rotate %0 by %c3_i32 dim 1 : vector<8x128xf32>, i32 -> vector<8x128xf32>
    %c0_1 = arith.constant 0 : index
    %c0_2 = arith.constant 0 : index
    %2 = vector.load %arg1[%c0_1, %c0_2] : memref<8x128xf32, #tpu.memory_space<vmem>>, vector<8x128xf32>
    tpu.vector_store %arg1[%c0_1, %c0_2], %1 {strides = array<i32>} : memref<8x128xf32, #tpu.memory_space<vmem>>, vector<8x128xf32>,
    return
  }
}

</mosaic_0001>

<llo_original>
// kernel: tpu_custom_call.1
$region0: #{tpu_custom_call.1}
  #allocation0 [shape = 'u32[]', space=smem, size = 0x4, offset = 0x4, fixed_abs, tag = 'smem constant byte address 0x4 - core index']
  #allocation1 [shape = 'u32[144,128]{1,0:T(1,128)}', space=vmem, size = 0x12000, scoped, tag = 'internal scratch']
  %s0 = inlined_call_operand.hbm [shape: f32[8,128], index: 0, kind: input, shape index: {}]
  %s1 = inlined_call_operand.hbm [shape: f32[8,128], index: 1, kind: output, shape index: {}]
  %s2 = sld [smem:[#allocation0]]
  $region18: #{tpu_custom_call.1} parent=0
    _
  %s4 = ssub.s32 1, %s2
  %s5 = scalar_select 0, %s4, %s2
  $region1: #{tpu_custom_call.1} parent=0
    #allocation2 [shape = 'u8[4096]{0}', space=vmem, size = 0x1000, scoped, tag = 'input window, operand 0, single buffered']
    #allocation3 [shape = 's32[1]{0}', space=sflag, size = 0x4, scoped, tag = 'scoped memory for tpu_custom_call.1']
    #allocation4 [shape = 's32[1]{0}', space=sflag, size = 0x4, scoped, tag = 'scoped memory for tpu_custom_call.1']
    #allocation5 [shape = 'u8[4096]{0}', space=vmem, size = 0x1000, scoped, tag = 'output window, operand 0, single buffered']
    %6 = vsyncpa [#allocation3], 0
    %7 = vsyncpa [#allocation4], 0
    // Predicated region
    $region2: #{tpu_custom_call.1} parent=1 // pred_check
      _
    $region3: #{tpu_custom_call.1} parent=1 // pred_check_branch
      %9 = sbr.rel (0) target = $region5
    $region4: #{tpu_custom_call.1} parent=1 // pred_region
      %s11 = ssub.s32 128, 128
      %12 = vsyncadd [#allocation3], %s11
      %s14 = sshll.u32 [#allocation2], 4
      %s15 = int_to_ptr.vmem [resolvable:$true] %s14
      %17 = dma.hbm_to_vmem [thread:$0]  %s0, 128, %s15, [#allocation3]
    $region5: #{tpu_custom_call.1} parent=1 // pred_fallthru
      _
    // Predicated region
    $region6: #{tpu_custom_call.1} parent=1 // pred_check
      _
    $region7: #{tpu_custom_call.1} parent=1 // pred_check_branch
      %19 = sbr.rel (0) target = $region9
    $region8: #{tpu_custom_call.1} parent=1 // pred_region
      %20 = dma.done [#allocation3], 128
    $region9: #{tpu_custom_call.1} parent=1 // pred_fallthru
      _
    %v21 = vld [vmem:[#allocation2] sm:$0xff]
    %22 = vrot.lane.b32.xlu0 %v21, 3
    %v23 = vpop.permute.xlu0 %22
    %24 = vst [vmem:[#allocation5] sm:$0xff] %v23
    // Predicated region
    $region10: #{tpu_custom_call.1} parent=1 // pred_check
      _
    $region11: #{tpu_custom_call.1} parent=1 // pred_check_branch
      %26 = sbr.rel (0) target = $region13
    $region12: #{tpu_custom_call.1} parent=1 // pred_region
      %s28 = ssub.s32 128, 128
      %29 = vsyncadd [#allocation4], %s28
      %s31 = sshll.u32 [#allocation5], 4
      %s32 = int_to_ptr.vmem [resolvable:$true] %s31
      %34 = dma.vmem_to_hbm [thread:$0]  %s32, 128, %s1, [#allocation4]
    $region13: #{tpu_custom_call.1} parent=1 // pred_fallthru
      _
    // Predicated region
    $region14: #{tpu_custom_call.1} parent=1 // pred_check
      _
    $region15: #{tpu_custom_call.1} parent=1 // pred_check_branch
      %36 = sbr.rel (0) target = $region17
    $region16: #{tpu_custom_call.1} parent=1 // pred_region
      %37 = dma.done [#allocation4], 128
    $region17: #{tpu_custom_call.1} parent=1 // pred_fallthru
      _
    %38 = vsyncpa [#allocation3], 1
    %39 = vsyncpa [#allocation4], 1

</llo_original>
